<compile_context>
chip_gen: v5e
topology: v5e:2x2
jax: 0.10.0
libtpu: 0.0.40
codegen_flags: <defaults>
</compile_context>

<pallas_src>
import jax
import jax.numpy as jnp
import numpy as np
from jax.experimental import pallas as pl
from jax.experimental.pallas import tpu as pltpu

EPS = 1e-5  # nn.BatchNorm2d default eps


def _conv_stats_kernel(p_ref, w_ref, stats_ref):
    # p_ref: (TM, KC) bf16, w_ref: (KC, CP) bf16, stats_ref: (1, 8, CP) f32
    acc = jnp.dot(p_ref[...], w_ref[...], preferred_element_type=jnp.float32)  # (TM, CP)
    s1 = jnp.sum(acc, axis=0, keepdims=True)        # per-channel sum       (1, CP)
    s2 = jnp.sum(acc * acc, axis=0, keepdims=True)  # per-channel sum of sq (1, CP)
    cp = acc.shape[1]
    row = jax.lax.broadcasted_iota(jnp.int32, (8, cp), 0)
    packed = jnp.where(row == 0, s1, 0.0) + jnp.where(row == 1, s2, 0.0)  # rows 0/1 used
    stats_ref[0] = packed


def _conv_bn_relu_kernel(p_ref, w_ref, scale_ref, bias_ref, o_ref):
    # Fused epilogue: one mul + one add + one max per element (lean for v5e VPU).
    acc = jnp.dot(p_ref[...], w_ref[...], preferred_element_type=jnp.float32)
    o_ref[...] = jnp.maximum(acc * scale_ref[...] + bias_ref[...], 0.0)


def unit_forward(x_nchw, w_oihw, gamma, beta, *, tm=512):
    """Forward pass of Unit. x_nchw: (N, Cin, H, W), w_oihw: (Cout, Cin, 3, 3)."""
    n, cin, h, w = x_nchw.shape
    cout, _, kh, kw = w_oihw.shape
    assert (kh, kw) == (3, 3)

    m = n * h * w
    kc = kh * kw * cin                     # folded K dim (=36 for Cin=4)
    cp = pl.cdiv(cout, 128) * 128          # lane-dense padded channel count

    tm = max(8, min(tm, pl.cdiv(m, 8) * 8))
    m_pad = pl.cdiv(m, tm) * tm
    num_tiles = m_pad // tm

    # NCHW -> NHWC (channels on lanes), bf16, spatial pad=1 (stride=1).
    x_nhwc = jnp.transpose(x_nchw, (0, 2, 3, 1)).astype(jnp.bfloat16)
    xp = jnp.pad(x_nhwc, ((0, 0), (1, 1), (1, 1), (0, 0)))

    # Folded im2col built once: (M, 9*Cin) bf16.
    # TODO(synk): for very large inputs, gather the 3x3 halo in-kernel via manual DMA
    # instead of materializing the 9x-folded patch matrix in HBM.
    cols = [
        xp[:, i : i + h, j : j + w, :].reshape(m, cin)
        for i in range(kh)
        for j in range(kw)
    ]
    patches = jnp.concatenate(cols, axis=1)                 # (M, KC) bf16
    patches = jnp.pad(patches, ((0, m_pad - m), (0, 0)))    # zero rows: contribute 0 to sums

    # (Cout, Cin, KH, KW) -> (KH*KW*Cin, Cout_pad) bf16, rows match patch column order.
    w_flat = jnp.transpose(w_oihw, (2, 3, 1, 0)).reshape(kc, cout)
    w_flat = jnp.pad(w_flat, ((0, 0), (0, cp - cout))).astype(jnp.bfloat16)

    cparams = pltpu.CompilerParams(
        dimension_semantics=("parallel",),
        vmem_limit_bytes=32 * 1024 * 1024,  # safe on v5e/v6e (128 MiB) and v7x (64 MiB)
    )

    # ---- Pass 1: conv + per-tile partial per-channel sum / sum-of-squares ----
    stats = pl.pallas_call(
        _conv_stats_kernel,
        out_shape=jax.ShapeDtypeStruct((num_tiles, 8, cp), jnp.float32),
        grid=(num_tiles,),
        in_specs=[
            pl.BlockSpec((tm, kc), lambda i: (i, 0)),
            pl.BlockSpec((kc, cp), lambda i: (0, 0)),
        ],
        out_specs=pl.BlockSpec((1, 8, cp), lambda i: (i, 0, 0)),
        compiler_params=cparams,
    )(patches, w_flat)

    # Tiny global reduction + fold BN affine into a single per-channel scale/bias (f32).
    tot = jnp.sum(stats, axis=0)                           # (8, CP)
    mean = tot[0] / m                                      # true M, not padded M
    var = jnp.maximum(tot[1] / m - mean * mean, 0.0)       # biased var (train-mode BN)
    inv_std = jax.lax.rsqrt(var + EPS)

    gamma_p = jnp.pad(gamma.astype(jnp.float32), (0, cp - cout))
    beta_p = jnp.pad(beta.astype(jnp.float32), (0, cp - cout))
    scale = (gamma_p * inv_std).reshape(1, cp)
    bias = (beta_p - mean * gamma_p * inv_std).reshape(1, cp)

    # ---- Pass 2: recompute conv tile, apply fused scale/bias + ReLU (lane-dense out) ----
    out_pad = pl.pallas_call(
        _conv_bn_relu_kernel,
        out_shape=jax.ShapeDtypeStruct((m_pad, cp), jnp.float32),
        grid=(num_tiles,),
        in_specs=[
            pl.BlockSpec((tm, kc), lambda i: (i, 0)),
            pl.BlockSpec((kc, cp), lambda i: (0, 0)),
            pl.BlockSpec((1, cp), lambda i: (0, 0)),
            pl.BlockSpec((1, cp), lambda i: (0, 0)),
        ],
        out_specs=pl.BlockSpec((tm, cp), lambda i: (i, 0)),
        compiler_params=cparams,
    )(patches, w_flat, scale, bias)

    # (M_pad, CP) -> (N, H, W, Cout) -> NCHW
    out = out_pad[:m, :cout].reshape(n, h, w, cout)
    return jnp.transpose(out, (0, 3, 1, 2))


def unit_reference(x_nchw, w_oihw, gamma, beta):
    """Pure-JAX reference matching PyTorch Unit.forward (BN in training mode)."""
    y = jax.lax.conv_general_dilated(
        x_nchw,
        w_oihw,
        window_strides=(1, 1),
        padding=((1, 1), (1, 1)),
        dimension_numbers=("NCHW", "OIHW", "NCHW"),
    )
    mean = jnp.mean(y, axis=(0, 2, 3), keepdims=True)
    var = jnp.mean(jnp.square(y - mean), axis=(0, 2, 3), keepdims=True)
    yn = (y - mean) * jax.lax.rsqrt(var + EPS)
    yn = yn * gamma.reshape(1, -1, 1, 1) + beta.reshape(1, -1, 1, 1)
    return jnp.maximum(yn, 0.0)


if __name__ == "__main__":
    # Small shapes consistent with the module: Unit(in_channels=4, out_channels=8)
    N, CIN, COUT, H, W = 2, 4, 8, 16, 16

    key = jax.random.PRNGKey(0)
    kx, kw, kg, kb = jax.random.split(key, 4)
    x = jax.random.normal(kx, (N, CIN, H, W), dtype=jnp.float32)
    conv_w = 0.1 * jax.random.normal(kw, (COUT, CIN, 3, 3), dtype=jnp.float32)
    gamma = 1.0 + 0.1 * jax.random.normal(kg, (COUT,), dtype=jnp.float32)
    beta = 0.1 * jax.random.normal(kb, (COUT,), dtype=jnp.float32)

    # tm=128 -> 4-tile grid on M=512: exercises pipelined grid + cross-tile BN stats.
    out = jax.block_until_ready(unit_forward(x, conv_w, gamma, beta, tm=128))

    # Reference on bf16-rounded operands (the kernel feeds the MXU bf16 operands with
    # f32 accumulation), so the comparison isolates kernel correctness from dtype choice.
    x_r = x.astype(jnp.bfloat16).astype(jnp.float32)
    w_r = conv_w.astype(jnp.bfloat16).astype(jnp.float32)
    ref = jax.block_until_ready(unit_reference(x_r, w_r, gamma, beta))

    np.testing.assert_allclose(np.asarray(out), np.asarray(ref), rtol=2e-3, atol=2e-3)
    print("KERNEL_OK")
</pallas_src>

<mosaic_0001>
module attributes {stable_mosaic.version = 11 : i64} {
  func.func @_conv_stats_kernel(%arg0: i32, %arg1: memref<128x36xbf16, #tpu.memory_space<vmem>>, %arg2: memref<36x128xbf16, #tpu.memory_space<vmem>>, %arg3: memref<1x8x128xf32, #tpu.memory_space<vmem>>) attributes {dimension_semantics = [#tpu.dimension_semantics<parallel>], iteration_bounds = array<i64: 4>, scalar_prefetch = 0 : i64, scratch_operands = 0 : i64, tpu.core_type = #tpu.core_type<tc>, window_params = [{transform_indices = @transform_0, window_bounds = array<i64: 128, 36>}, {pipeline_mode = #tpu.pipeline_mode<synchronous>, transform_indices = @transform_1, window_bounds = array<i64: 36, 128>}, {transform_indices = @transform_2, window_bounds = array<i64: 1, 8, 128>}]} {
    %c0 = arith.constant 0 : index
    %c0_0 = arith.constant 0 : index
    %0 = vector.load %arg1[%c0, %c0_0] : memref<128x36xbf16, #tpu.memory_space<vmem>>, vector<128x36xbf16>
    %c0_1 = arith.constant 0 : index
    %c0_2 = arith.constant 0 : index
    %1 = vector.load %arg2[%c0_1, %c0_2] : memref<36x128xbf16, #tpu.memory_space<vmem>>, vector<36x128xbf16>
    %cst = arith.constant dense<0.000000e+00> : vector<128x128xf32>
    %2 = tpu.matmul %0, %1, %cst {dimension_numbers = #tpu.dot_dimension_numbers<[1], [0], [0], [1], [0, 0, 1, 1], [], []>} : vector<128x36xbf16>, vector<36x128xbf16>, vector<128x128xf32> -> vector<128x128xf32>
    %cst_3 = arith.constant dense<0.000000e+00> : vector<128xf32>
    %3 = vector.multi_reduction <add>, %2, %cst_3 [0] : vector<128x128xf32> to vector<128xf32>
    %4 = vector.shape_cast %3 : vector<128xf32> to vector<1x128xf32>
    %5 = arith.mulf %2, %2 : vector<128x128xf32>
    %cst_4 = arith.constant dense<0.000000e+00> : vector<128xf32>
    %6 = vector.multi_reduction <add>, %5, %cst_4 [0] : vector<128x128xf32> to vector<128xf32>
    %7 = vector.shape_cast %6 : vector<128xf32> to vector<1x128xf32>
    %8 = tpu.iota {dimensions = array<i32: 0>} : vector<8x128xi32>
    %c0_i32 = arith.constant 0 : i32
    %9 = vector.broadcast %c0_i32 : i32 to vector<8x128xi32>
    %10 = arith.cmpi eq, %8, %9 : vector<8x128xi32>
    %cst_5 = arith.constant 0.000000e+00 : f32
    %11 = vector.shape_cast %4 : vector<1x128xf32> to vector<1x128xf32>
    %12 = vector.broadcast %11 : vector<1x128xf32> to vector<8x128xf32>
    %13 = vector.broadcast %cst_5 : f32 to vector<8x128xf32>
    %14 = arith.select %10, %12, %13 : vector<8x128xi1>, vector<8x128xf32>
    %c1_i32 = arith.constant 1 : i32
    %15 = vector.broadcast %c1_i32 : i32 to vector<8x128xi32>
    %16 = arith.cmpi eq, %8, %15 : vector<8x128xi32>
    %cst_6 = arith.constant 0.000000e+00 : f32
    %17 = vector.shape_cast %7 : vector<1x128xf32> to vector<1x128xf32>
    %18 = vector.broadcast %17 : vector<1x128xf32> to vector<8x128xf32>
    %19 = vector.broadcast %cst_6 : f32 to vector<8x128xf32>
    %20 = arith.select %16, %18, %19 : vector<8x128xi1>, vector<8x128xf32>
    %21 = arith.addf %14, %20 : vector<8x128xf32>
    %c0_7 = arith.constant 0 : index
    %c0_8 = arith.constant 0 : index
    %c0_9 = arith.constant 0 : index
    %22 = vector.load %arg3[%c0_7, %c0_8, %c0_9] : memref<1x8x128xf32, #tpu.memory_space<vmem>>, vector<1x8x128xf32>
    %23 = vector.shape_cast %22 : vector<1x8x128xf32> to vector<8x128xf32>
    %24 = vector.shape_cast %21 : vector<8x128xf32> to vector<1x8x128xf32>
    tpu.vector_store %arg3[%c0_7, %c0_8, %c0_9], %24 {strides = array<i32>} : memref<1x8x128xf32, #tpu.memory_space<vmem>>, vector<1x8x128xf32>,
    return
  }
  func.func @transform_0(%arg0: i32) -> (i32, i32) {
    %c0_i32 = arith.constant 0 : i32
    %c0_i32_0 = arith.constant 0 : i32
    return %arg0, %c0_i32 : i32, i32
  }
  func.func @transform_1(%arg0: i32) -> (i32, i32) {
    %c0_i32 = arith.constant 0 : i32
    %c0_i32_0 = arith.constant 0 : i32
    %c0_i32_1 = arith.constant 0 : i32
    return %c0_i32, %c0_i32_0 : i32, i32
  }
  func.func @transform_2(%arg0: i32) -> (i32, i32, i32) {
    %c0_i32 = arith.constant 0 : i32
    %c0_i32_0 = arith.constant 0 : i32
    %c0_i32_1 = arith.constant 0 : i32
    return %arg0, %c0_i32, %c0_i32_0 : i32, i32, i32
  }
}

</mosaic_0001>

<llo_original>
// kernel: tpu_custom_call.1
$region0: #{tpu_custom_call.1}
  #allocation0 [shape = 'u32[]', space=smem, size = 0x4, offset = 0x4, fixed_abs, tag = 'smem constant byte address 0x4 - core index']
  #allocation1 [shape = 'u32[72,128]{1,0:T(1,128)}', space=vmem, size = 0x9000, scoped, tag = 'internal scratch']
  %s0 = inlined_call_operand.vmem [shape: bf16[512,36], index: 0, kind: input, shape index: {}]
  %s1 = inlined_call_operand.vmem [shape: bf16[36,128], index: 1, kind: input, shape index: {}]
  %s2 = inlined_call_operand.hbm [shape: f32[4,8,128], index: 2, kind: output, shape index: {}]
  %s3 = sld [smem:[#allocation0]]
  $region41: #{tpu_custom_call.1} parent=0
    _
  %s5 = ssub.s32 1, %s3
  %s6 = scalar_select 0, %s5, %s3
  $region1: #{tpu_custom_call.1} parent=0
    #allocation2 [shape = 'u8[8192]{0}', space=vmem, size = 0x2000, scoped, tag = 'output window, operand 0']
    #allocation3 [shape = 's32[2]{0}', space=sflag, size = 0x8, scoped, tag = 'scoped memory for tpu_custom_call.1']
    %7 = vsyncpa [#allocation3], 0
    %s8 = scalar_lea.sflag [#allocation3], 1
    %9 = vsyncpa %s8, 0
    loop: start=0, step=1, limit=6
    $region2: #{tpu_custom_call.1} parent=1 // loop_pre_header
      _
    $region3: #{tpu_custom_call.1} parent=1 // loop_header
      %s11 = sphi 0, %s15
      %p12 = scmp.ge.s32.totalorder %s11, 6
      %s21 = sphi 0, %s23
      %s24 = sphi 0, %s21
      %s25 = sphi 0, %s24
      %s41 = sphi 0, %s25
      %s45 = sphi 0, %s45
      %s47 = sphi 0, %s45
      %s48 = sphi 0, %s47
      %s62 = sphi 0, %s48
      %s68 = sphi 0, %s70
      %s71 = sphi 0, %s68
      %s72 = sphi 0, %s71
      %s88 = sphi 0, %s72
    $region4: #{tpu_custom_call.1} parent=1 // loop_header_branch
      %14 = sbr.rel (%p12) target = $region8
    $region5: #{tpu_custom_call.1} parent=1 // loop_body
      %s16 = ssub.s32 %s11, 1
      %s17 = ssub.s32 %s11, 2
      %s18 = sadd.s32 %s11, 1
      %s19 = ssub.s32 %s11, %s18
      %p20 = scmp.eq.s32.totalorder %s19, 0
      %s22 = sadd.s32 %s21, 1
      %s23 = scalar_select %p20, %s21, %s22
      %p26 = pneg %p20
      %p27 = scmp.eq.s32.totalorder %s11, 3
      %p28 = por %p26, %p27
      %p29 = scmp.ne.s32.totalorder %s21, %s24
      %p30 = scmp.eq.s32.totalorder %s11, 0
      %p31 = por %p29, %p30
      %p32 = scmp.ne.s32.totalorder %s21, %s24
      %p33 = scmp.eq.s32.totalorder %s16, 3
      %p34 = por %p32, %p33
      %p35 = scmp.ne.s32.totalorder %s24, %s25
      %p36 = scmp.eq.s32.totalorder %s16, 0
      %p37 = por %p35, %p36
      %p38 = scmp.ne.s32.totalorder %s24, %s25
      %p39 = scmp.eq.s32.totalorder %s17, 3
      %p40 = por %p38, %p39
      %p42 = scmp.ne.s32.totalorder %s25, %s41
      %p43 = scmp.eq.s32.totalorder %s17, 0
      %p44 = por %p42, %p43
      %s46 = sadd.s32 %s45, 1
      %p49 = scmp.eq.s32.totalorder %s11, 3
      %p50 = scmp.ne.s32.totalorder %s45, %s47
      %p51 = scmp.eq.s32.totalorder %s11, 0
      %p52 = por %p50, %p51
      %p53 = scmp.ne.s32.totalorder %s45, %s47
      %p54 = scmp.eq.s32.totalorder %s16, 3
      %p55 = por %p53, %p54
      %p56 = scmp.ne.s32.totalorder %s47, %s48
      %p57 = scmp.eq.s32.totalorder %s16, 0
      %p58 = por %p56, %p57
      %p59 = scmp.ne.s32.totalorder %s47, %s48
      %p60 = scmp.eq.s32.totalorder %s17, 3
      %p61 = por %p59, %p60
      %p63 = scmp.ne.s32.totalorder %s48, %s62
      %p64 = scmp.eq.s32.totalorder %s17, 0
      %p65 = por %p63, %p64
      %s66 = ssub.s32 %s11, %s18
      %p67 = scmp.eq.s32.totalorder %s66, 0
      %s69 = sadd.s32 %s68, 1
      %s70 = scalar_select %p67, %s68, %s69
      %p73 = pneg %p67
      %p74 = scmp.eq.s32.totalorder %s11, 3
      %p75 = por %p73, %p74
      %p76 = scmp.ne.s32.totalorder %s68, %s71
      %p77 = scmp.eq.s32.totalorder %s11, 0
      %p78 = por %p76, %p77
      %p79 = scmp.ne.s32.totalorder %s68, %s71
      %p80 = scmp.eq.s32.totalorder %s16, 3
      %p81 = por %p79, %p80
      %p82 = scmp.ne.s32.totalorder %s71, %s72
      %p83 = scmp.eq.s32.totalorder %s16, 0
      %p84 = por %p82, %p83
      %p85 = scmp.ne.s32.totalorder %s71, %s72
      %p86 = scmp.eq.s32.totalorder %s17, 3
      %p87 = por %p85, %p86
      %p89 = scmp.ne.s32.totalorder %s72, %s88
      %p90 = scmp.eq.s32.totalorder %s17, 0
      %p91 = por %p89, %p90
      %p92 = scmp.le.s32.totalorder 1, %s11
      %p93 = scmp.lt.s32.totalorder %s11, 5
      %p94 = pnand %p92, %p93
      %p95 = pneg %p94
      // Predicated region
      $region9: #{tpu_custom_call.1} parent=5 // pred_check
        _
      $region10: #{tpu_custom_call.1} parent=5 // pred_check_branch
        %97 = sbr.rel (%p94) target = $region12
      $region11: #{tpu_custom_call.1} parent=5 // pred_region
        %s98 = ssub.s32 %s11, 1
        // Predicated region
        $region13: #{tpu_custom_call.1} parent=11 // pred_check
          %p99 = pneg %p58
        $region14: #{tpu_custom_call.1} parent=11 // pred_check_branch
          %101 = sbr.rel (%p99) target = $region16
        $region15: #{tpu_custom_call.1} parent=11 // pred_region
          _
        $region16: #{tpu_custom_call.1} parent=11 // pred_fallthru
          _
      $region12: #{tpu_custom_call.1} parent=5 // pred_fallthru
        _
      %p102 = scmp.lt.s32.totalorder %s11, 4
      // Predicated region
      $region17: #{tpu_custom_call.1} parent=5 // pred_check
        %p103 = pneg %p102
      $region18: #{tpu_custom_call.1} parent=5 // pred_check_branch
        %105 = sbr.rel (%p103) target = $region20
      $region19: #{tpu_custom_call.1} parent=5 // pred_region
        // Predicated region
        $region21: #{tpu_custom_call.1} parent=19 // pred_check
          %p106 = pneg %p31
        $region22: #{tpu_custom_call.1} parent=19 // pred_check_branch
          %108 = sbr.rel (%p106) target = $region24
        $region23: #{tpu_custom_call.1} parent=19 // pred_region
          %s109 = smul.u32 16, %s11
          %p110 = scmp.lt.s32.totalorder %s109, 63
          %s111 = scalar_select %p110, %s109, 63
          %s112 = smul.addr %s111, 4
          %s113 = scalar_lea.vmem %s0, %s112
          %s114 = smul.u32 16, %s11
        $region24: #{tpu_custom_call.1} parent=19 // pred_fallthru
          _
      $region20: #{tpu_custom_call.1} parent=5 // pred_fallthru
        _
      %p115 = scmp.le.s32.totalorder 1, %s11
      %p116 = scmp.lt.s32.totalorder %s11, 5
      %p117 = pnand %p115, %p116
      %p118 = pneg %p117
      // Predicated region
      $region25: #{tpu_custom_call.1} parent=5 // pred_check
        _
      $region26: #{tpu_custom_call.1} parent=5 // pred_check_branch
        %120 = sbr.rel (%p117) target = $region28
      $region27: #{tpu_custom_call.1} parent=5 // pred_region
        %s121 = ssub.s32 %s11, 1
        %s122 = smul.u32 16, %s16
        %p123 = scmp.lt.s32.totalorder %s122, 63
        %s124 = scalar_select %p123, %s122, 63
        %s125 = smul.addr %s124, 4
        %s126 = scalar_lea.vmem %s0, %s125
        %p127 = pneg %p37
        %p128 = pneg %p34
        %p129 = pneg %p58
        %p130 = pneg %p55
        %p131 = pneg %p84
        %p132 = pneg %p81
        %s133 = sand.u32 %s71, 1
        %s134 = scalar_lea.sflag [#allocation3], %s133
        %s135 = sand.u32 %s71, 1
        %s136 = smul.addr %s135, 8
        %s137 = scalar_lea.vmem [#allocation2], %s136
        %s138 = smul.u32 16, %s16
        %p139 = scmp.lt.s32.totalorder %s138, 63
        %s140 = scalar_select %p139, %s138, 63
        %s141 = smul.addr %s140, 4
        %s142 = scalar_lea.vmem %s0, %s141
        %s143 = smul.u32 16, %s16
        %v145 = vld [vmem:[%s142] sm:$0xf]
        %v146 = vld [vmem:[%s142 + $0x4] sm:$0xf]
        %v147 = vld [vmem:[%s142 + $0x8] sm:$0xf]
        %v148 = vld [vmem:[%s142 + $0xc] sm:$0xf]
        %v149 = vld [vmem:[%s142 + $0x10] sm:$0xf]
        %v150 = vld [vmem:[%s142 + $0x14] sm:$0xf]
        %v151 = vld [vmem:[%s142 + $0x18] sm:$0xf]
        %v152 = vld [vmem:[%s142 + $0x1c] sm:$0xf]
        %v153 = vld [vmem:[%s142 + $0x20] sm:$0xf]
        %v154 = vld [vmem:[%s142 + $0x24] sm:$0xf]
        %v155 = vld [vmem:[%s142 + $0x28] sm:$0xf]
        %v156 = vld [vmem:[%s142 + $0x2c] sm:$0xf]
        %v157 = vld [vmem:[%s142 + $0x30] sm:$0xf]
        %v158 = vld [vmem:[%s142 + $0x34] sm:$0xf]
        %v159 = vld [vmem:[%s142 + $0x38] sm:$0xf]
        %v160 = vld [vmem:[%s142 + $0x3c] sm:$0xf]
        %v161 = vld [vmem:[%s1] sm:$0xf]
        %v162 = vld [vmem:[%s1 + $0x4] sm:$0xf]
        %v163 = vld [vmem:[%s1 + $0x8] sm:$0xf]
        %v164 = vld [vmem:[%s1 + $0xc] sm:$0xf]
        %v165 = vld [vmem:[%s1 + $0x10] sm:$0x3]
        %v182 = vunpack.c.l.b16 %v145
        %v183 = vunpack.c.l.b16 %v146
        %v184 = vunpack.c.l.b16 %v147
        %v185 = vunpack.c.l.b16 %v148
        %v186 = vunpack.c.l.b16 %v149
        %v187 = vunpack.c.l.b16 %v150
        %v188 = vunpack.c.l.b16 %v151
        %v189 = vunpack.c.l.b16 %v152
        %v190 = vunpack.c.l.b16 %v153
        %v191 = vunpack.c.l.b16 %v154
        %v192 = vunpack.c.l.b16 %v155
        %v193 = vunpack.c.l.b16 %v156
        %v194 = vunpack.c.l.b16 %v157
        %v195 = vunpack.c.l.b16 %v158
        %v196 = vunpack.c.l.b16 %v159
        %v197 = vunpack.c.l.b16 %v160
        %v198 = vpack.c.b16 %v183, %v182
        %v199 = vpack.c.b16 %v185, %v184
        %v200 = vpack.c.b16 %v187, %v186
        %v201 = vpack.c.b16 %v189, %v188
        %v202 = vpack.c.b16 %v191, %v190
        %v203 = vpack.c.b16 %v193, %v192
        %v204 = vpack.c.b16 %v195, %v194
        %v205 = vpack.c.b16 %v197, %v196
        %v211 = vunpack.c.l.b16 %v161
        %v212 = vunpack.c.l.b16 %v162
        %v213 = vunpack.c.l.b16 %v163
        %v214 = vunpack.c.l.b16 %v164
        %v215 = vunpack.c.l.b16 %v165
        %v216 = vpack.c.b16 %v212, %v211
        %v217 = vpack.c.b16 %v214, %v213
        %v218 = vpack.c.b16 %v215, %v215
        %vm221 = vcmask 293888
        %v223 = vsel %vm221, %v198, 0
        %v226 = vsel %vm221, %v199, 0
        %v229 = vsel %vm221, %v200, 0
        %v232 = vsel %vm221, %v201, 0
        %v235 = vsel %vm221, %v202, 0
        %v238 = vsel %vm221, %v203, 0
        %v241 = vsel %vm221, %v204, 0
        %v244 = vsel %vm221, %v205, 0
        %vm246 = vcmask 1041408
        %v248 = vsel %vm246, %v218, 0
        %250 = vmatpush.bf16.msra.mxu0 0
        %251 = vmatpush.bf16.msra.mxu0 0
        %252 = vmatpush.bf16.msra.mxu0 0
        %253 = vmatpush.bf16.msra.mxu0 0
        %254 = vmatpush.bf16.msra.mxu0 0
        %255 = vmatpush.bf16.msra.mxu0 %v248
        %256 = vmatpush.bf16.msra.mxu0 %v217
        %257 = vmatpush.bf16.msra.mxu0 %v216
        %258 = vmatmul.bf16.gmra.mxu0 %v223
        %v259 = vpop.f32.mrf.mxu0
        %v260 = vadd.f32 0.0, %v259
        %v261 = vpop.f32.mrf.mxu0
        %v262 = vadd.f32 0.0, %v261
        %263 = vmatmul.bf16.gmra.mxu0 %v226
        %v264 = vpop.f32.mrf.mxu0
        %v265 = vadd.f32 0.0, %v264
        %v266 = vpop.f32.mrf.mxu0
        %v267 = vadd.f32 0.0, %v266
        %268 = vmatmul.bf16.gmra.mxu0 %v229
        %v269 = vpop.f32.mrf.mxu0
        %v270 = vadd.f32 0.0, %v269
        %v271 = vpop.f32.mrf.mxu0
        %v272 = vadd.f32 0.0, %v271
        %273 = vmatmul.bf16.gmra.mxu0 %v232
        %v274 = vpop.f32.mrf.mxu0
        %v275 = vadd.f32 0.0, %v274
        %v276 = vpop.f32.mrf.mxu0
        %v277 = vadd.f32 0.0, %v276
        %278 = vmatmul.bf16.gmra.mxu0 %v235
        %v279 = vpop.f32.mrf.mxu0
        %v280 = vadd.f32 0.0, %v279
        %v281 = vpop.f32.mrf.mxu0
        %v282 = vadd.f32 0.0, %v281
        %283 = vmatmul.bf16.gmra.mxu0 %v238
        %v284 = vpop.f32.mrf.mxu0
        %v285 = vadd.f32 0.0, %v284
        %v286 = vpop.f32.mrf.mxu0
        %v287 = vadd.f32 0.0, %v286
        %288 = vmatmul.bf16.gmra.mxu0 %v241
        %v289 = vpop.f32.mrf.mxu0
        %v290 = vadd.f32 0.0, %v289
        %v291 = vpop.f32.mrf.mxu0
        %v292 = vadd.f32 0.0, %v291
        %293 = vmatmul.bf16.gmra.mxu0 %v244
        %v294 = vpop.f32.mrf.mxu0
        %v295 = vadd.f32 0.0, %v294
        %v296 = vpop.f32.mrf.mxu0
        %v297 = vadd.f32 0.0, %v296
        %298 = vdwg.mxu0
        %v299 = vadd.f32 %v260, %v262
        %v300 = vadd.f32 %v299, %v265
        %v301 = vadd.f32 %v300, %v267
        %v302 = vadd.f32 %v301, %v270
        %v303 = vadd.f32 %v302, %v272
        %v304 = vadd.f32 %v303, %v275
        %v305 = vadd.f32 %v304, %v277
        %v306 = vadd.f32 %v305, %v280
        %v307 = vadd.f32 %v306, %v282
        %v308 = vadd.f32 %v307, %v285
        %v309 = vadd.f32 %v308, %v287
        %v310 = vadd.f32 %v309, %v290
        %v311 = vadd.f32 %v310, %v292
        %v312 = vadd.f32 %v311, %v295
        %v313 = vadd.f32 %v312, %v297
        %v314 = vrot.slane %v313, 4
        %v315 = vadd.f32 %v313, %v314
        %v316 = vrot.slane %v315, 2
        %v317 = vadd.f32 %v315, %v316
        %v318 = vrot.slane %v317, 1
        %v319 = vadd.f32 %v317, %v318
        %v320 = vmul.f32 %v260, %v260
        %v321 = vmul.f32 %v262, %v262
        %v322 = vmul.f32 %v265, %v265
        %v323 = vmul.f32 %v267, %v267
        %v324 = vmul.f32 %v270, %v270
        %v325 = vmul.f32 %v272, %v272
        %v326 = vmul.f32 %v275, %v275
        %v327 = vmul.f32 %v277, %v277
        %v328 = vmul.f32 %v280, %v280
        %v329 = vmul.f32 %v282, %v282
        %v330 = vmul.f32 %v285, %v285
        %v331 = vmul.f32 %v287, %v287
        %v332 = vmul.f32 %v290, %v290
        %v333 = vmul.f32 %v292, %v292
        %v334 = vmul.f32 %v295, %v295
        %v335 = vmul.f32 %v297, %v297
        %v336 = vadd.f32 %v320, %v321
        %v337 = vadd.f32 %v336, %v322
        %v338 = vadd.f32 %v337, %v323
        %v339 = vadd.f32 %v338, %v324
        %v340 = vadd.f32 %v339, %v325
        %v341 = vadd.f32 %v340, %v326
        %v342 = vadd.f32 %v341, %v327
        %v343 = vadd.f32 %v342, %v328
        %v344 = vadd.f32 %v343, %v329
        %v345 = vadd.f32 %v344, %v330
        %v346 = vadd.f32 %v345, %v331
        %v347 = vadd.f32 %v346, %v332
        %v348 = vadd.f32 %v347, %v333
        %v349 = vadd.f32 %v348, %v334
        %v350 = vadd.f32 %v349, %v335
        %v351 = vrot.slane %v350, 4
        %v352 = vadd.f32 %v350, %v351
        %v353 = vrot.slane %v352, 2
        %v354 = vadd.f32 %v352, %v353
        %v355 = vrot.slane %v354, 1
        %v356 = vadd.f32 %v354, %v355
        %v357 = vlaneseq
        %v358 = vshrl.u32 %v357, 7
        %vm359 = vcmp.eq.s32.totalorder %v358, 0
        %v360 = vsel %vm359, %v319, 0.0
        %vm361 = vcmp.eq.s32.totalorder %v358, 1
        %v362 = vsel %vm361, %v356, 0.0
        %v363 = vadd.f32 %v360, %v362
        %364 = vst [vmem:[%s137] sm:$0xff] %v363
        %s365 = sand.u32 %s71, 1
        %s366 = scalar_lea.sflag [#allocation3], %s365
        %s367 = sand.u32 %s71, 1
        %s368 = smul.addr %s367, 8
        %s369 = scalar_lea.vmem [#allocation2], %s368
        // Predicated region
        $region29: #{tpu_custom_call.1} parent=27 // pred_check
          %p370 = pneg %p81
        $region30: #{tpu_custom_call.1} parent=27 // pred_check_branch
          %372 = sbr.rel (%p370) target = $region32
        $region31: #{tpu_custom_call.1} parent=27 // pred_region
          %374 = vsyncadd %s366, 0
          %s375 = smul.addr %s16, 8
          %s376 = scalar_lea.hbm %s2, %s375
          %s378 = sshll.u32 %s369, 4
          %s379 = int_to_ptr.vmem [resolvable:$true] %s378
          %s380 = sshll.u32 %s376, 4
          %s381 = int_to_ptr.hbm [resolvable:$true] %s380
          %383 = dma.vmem_to_hbm [thread:$0]  %s379, 128, %s381, %s366
        $region32: #{tpu_custom_call.1} parent=27 // pred_fallthru
          _
      $region28: #{tpu_custom_call.1} parent=5 // pred_fallthru
        _
      %p384 = scmp.le.s32.totalorder 2, %s11
      // Predicated region
      $region33: #{tpu_custom_call.1} parent=5 // pred_check
        %p385 = pneg %p384
      $region34: #{tpu_custom_call.1} parent=5 // pred_check_branch
        %387 = sbr.rel (%p385) target = $region36
      $region35: #{tpu_custom_call.1} parent=5 // pred_region
        %s388 = ssub.s32 %s11, 2
        // Predicated region
        $region37: #{tpu_custom_call.1} parent=35 // pred_check
          %p389 = pneg %p87
        $region38: #{tpu_custom_call.1} parent=35 // pred_check_branch
          %391 = sbr.rel (%p389) target = $region40
        $region39: #{tpu_custom_call.1} parent=35 // pred_region
          %s392 = sand.u32 %s72, 1
          %s393 = scalar_lea.sflag [#allocation3], %s392
          %s394 = sand.u32 %s72, 1
          %s395 = smul.addr %s394, 8
          %s396 = scalar_lea.vmem [#allocation2], %s395
          %398 = dma.done %s393, 128
        $region40: #{tpu_custom_call.1} parent=35 // pred_fallthru
          _
      $region36: #{tpu_custom_call.1} parent=5 // pred_fallthru
        _
    $region6: #{tpu_custom_call.1} parent=1 // loop_footer
      %s15 = sadd.s32 1, %s11
    $region7: #{tpu_custom_call.1} parent=1 // loop_footer_branch
      %10 = sbr.rel target = $region3
    $region8: #{tpu_custom_call.1} parent=1 // loop_exit
      _
    %399 = vsyncpa [#allocation3], 1
    %s400 = scalar_lea.sflag [#allocation3], 1
    %401 = vsyncpa %s400, 1

</llo_original>
